<compile_context>
chip_gen: v7x
topology: tpu7x:2x2x1
jax: 0.10.0
libtpu: 0.0.40
codegen_flags: <defaults>
</compile_context>

<pallas_src>
import numpy as np
import jax
import jax.numpy as jnp
from jax.experimental import pallas as pl
from jax.experimental.pallas import tpu as pltpu


def _dice_loss_kernel(x_ref, t_ref, o_ref, acc_ref):
    """One grid step processes a lane-dense (N, Dc) chunk of the flattened inputs.

    acc_ref: VMEM (N, 3) running [intersection, sum(x), sum(t)] per sample.
    o_ref  : (1, 1) scalar loss, written on the last grid step only.
    """
    k = pl.program_id(0)

    @pl.when(k == 0)
    def _():
        acc_ref[...] = jnp.zeros_like(acc_ref)

    x = x_ref[...]  # (N, Dc) float32
    t = t_ref[...]  # (N, Dc) float32

    inter = jnp.sum(x * t, axis=1, keepdims=True)   # (N, 1)
    sx = jnp.sum(x, axis=1, keepdims=True)          # (N, 1)
    st = jnp.sum(t, axis=1, keepdims=True)          # (N, 1)
    acc_ref[...] += jnp.concatenate([inter, sx, st], axis=1)  # (N, 3)

    @pl.when(k == pl.num_programs(0) - 1)
    def _():
        a = acc_ref[...]                            # (N, 3)
        smooth = jnp.float32(1.0)
        n = x_ref.shape[0]
        per = 2.0 * (a[:, 0:1] + smooth) / (a[:, 1:2] + a[:, 2:3] + smooth)  # (N, 1)
        o_ref[...] = 1.0 - jnp.sum(per, axis=0, keepdims=True) / jnp.float32(n)


def dice_loss(input, target, *, chunk=None):
    """Pallas DiceLoss: input/target of shape (N, ...) -> scalar float32 loss."""
    N = target.shape[0]
    x = jnp.reshape(input, (N, -1)).astype(jnp.float32)
    t = jnp.reshape(target, (N, -1)).astype(jnp.float32)
    D = x.shape[1]

    # Choose chunk along the flattened feature axis. Default: single grid step
    # (whole problem resident in VMEM). Fall back to lane-dense 128-multiple
    # chunks only for very large inputs (double-buffered blocks stay well under
    # the scoped VMEM budget on every generation, including v7x's 64 MiB).
    if chunk is None:
        vmem_budget_elems = (4 * 1024 * 1024) // 4  # ~4 MiB per operand block (f32)
        if N * D <= vmem_budget_elems:
            chunk = D
        else:
            chunk = max(128, ((vmem_budget_elems // max(N, 1)) // 128) * 128)
    chunk = int(min(chunk, D))
    if chunk < D:
        chunk = max(128, (chunk // 128) * 128)      # lane-dense chunk
        if D % chunk:
            pad = chunk - D % chunk                 # zero pad: does not change sums
            x = jnp.pad(x, ((0, 0), (0, pad)))
            t = jnp.pad(t, ((0, 0), (0, pad)))
    D_pad = x.shape[1]
    grid = (D_pad // chunk,)

    out = pl.pallas_call(
        _dice_loss_kernel,
        out_shape=jax.ShapeDtypeStruct((1, 1), jnp.float32),
        grid_spec=pltpu.PrefetchScalarGridSpec(
            num_scalar_prefetch=0,
            grid=grid,
            in_specs=[
                pl.BlockSpec((N, chunk), lambda k: (0, k)),
                pl.BlockSpec((N, chunk), lambda k: (0, k)),
            ],
            out_specs=pl.BlockSpec((1, 1), lambda k: (0, 0)),
            scratch_shapes=[pltpu.VMEM((N, 3), jnp.float32)],
        ),
        compiler_params=pltpu.CompilerParams(
            dimension_semantics=("arbitrary",),  # reduction axis (accumulator resident)
        ),
    )(x, t)
    return out[0, 0]


def dice_loss_ref(input, target):
    """Pure-JAX reference mirroring the PyTorch DiceLoss forward."""
    N = target.shape[0]
    smooth = 1.0
    xf = jnp.reshape(input, (N, -1)).astype(jnp.float32)
    tf = jnp.reshape(target, (N, -1)).astype(jnp.float32)
    inter = jnp.sum(xf * tf, axis=1)
    loss = 2.0 * (inter + smooth) / (jnp.sum(xf, axis=1) + jnp.sum(tf, axis=1) + smooth)
    return 1.0 - jnp.sum(loss) / N


if __name__ == "__main__":
    key = jax.random.PRNGKey(0)
    k1, k2, k3, k4 = jax.random.split(key, 4)

    # Small case (matches a typical segmentation output): single grid step.
    x = jax.nn.sigmoid(jax.random.normal(k1, (2, 4, 16, 16), dtype=jnp.float32))
    t = (jax.random.uniform(k2, (2, 4, 16, 16)) > 0.5).astype(jnp.float32)
    out = dice_loss(x, t)
    jax.block_until_ready(out)
    ref = dice_loss_ref(x, t)
    np.testing.assert_allclose(np.asarray(out), np.asarray(ref), rtol=1e-4, atol=1e-5)

    # Larger case forcing the chunked (multi-step, accumulating) path.
    x2 = jax.nn.sigmoid(jax.random.normal(k3, (4, 8, 64, 64), dtype=jnp.float32))
    t2 = (jax.random.uniform(k4, (4, 8, 64, 64)) > 0.5).astype(jnp.float32)
    out2 = dice_loss(x2, t2, chunk=8192)
    jax.block_until_ready(out2)
    ref2 = dice_loss_ref(x2, t2)
    np.testing.assert_allclose(np.asarray(out2), np.asarray(ref2), rtol=1e-4, atol=1e-5)

    print("KERNEL_OK")
</pallas_src>

<mosaic_0001>
module attributes {stable_mosaic.version = 11 : i64} {
  func.func @_dice_loss_kernel(%arg0: i32, %arg1: memref<2x1024xf32, #tpu.memory_space<vmem>>, %arg2: memref<2x1024xf32, #tpu.memory_space<vmem>>, %arg3: memref<1x1xf32, #tpu.memory_space<vmem>>, %arg4: memref<2x3xf32, #tpu.memory_space<vmem>>) attributes {dimension_semantics = [#tpu.dimension_semantics<arbitrary>], iteration_bounds = array<i64: 1>, scalar_prefetch = 0 : i64, scratch_operands = 1 : i64, tpu.core_type = #tpu.core_type<tc>, window_params = [{transform_indices = @transform_0, window_bounds = array<i64: 2, 1024>}, {transform_indices = @transform_1, window_bounds = array<i64: 2, 1024>}, {pipeline_mode = #tpu.pipeline_mode<synchronous>, transform_indices = @transform_2, window_bounds = array<i64: 1, 1>}]} {
    %c0_i32 = arith.constant 0 : i32
    %0 = arith.cmpi eq, %arg0, %c0_i32 : i32
    %1 = arith.extui %0 : i1 to i32
    %c0_i32_0 = arith.constant 0 : i32
    %2 = arith.cmpi ne, %1, %c0_i32_0 : i32
    scf.if %2 {
      %cst_12 = arith.constant 0.000000e+00 : f32
      %19 = vector.broadcast %cst_12 : f32 to vector<2x3xf32>
      %c0_13 = arith.constant 0 : index
      %c0_14 = arith.constant 0 : index
      %20 = vector.load %arg4[%c0_13, %c0_14] : memref<2x3xf32, #tpu.memory_space<vmem>>, vector<2x3xf32>
      tpu.vector_store %arg4[%c0_13, %c0_14], %19 {strides = array<i32>} : memref<2x3xf32, #tpu.memory_space<vmem>>, vector<2x3xf32>,
    } else {
    }
    %c0 = arith.constant 0 : index
    %c0_1 = arith.constant 0 : index
    %3 = vector.load %arg1[%c0, %c0_1] : memref<2x1024xf32, #tpu.memory_space<vmem>>, vector<2x1024xf32>
    %c0_2 = arith.constant 0 : index
    %c0_3 = arith.constant 0 : index
    %4 = vector.load %arg2[%c0_2, %c0_3] : memref<2x1024xf32, #tpu.memory_space<vmem>>, vector<2x1024xf32>
    %5 = arith.mulf %3, %4 : vector<2x1024xf32>
    %cst = arith.constant dense<0.000000e+00> : vector<2xf32>
    %6 = vector.multi_reduction <add>, %5, %cst [1] : vector<2x1024xf32> to vector<2xf32>
    %7 = vector.shape_cast %6 : vector<2xf32> to vector<2x1xf32>
    %cst_4 = arith.constant dense<0.000000e+00> : vector<2xf32>
    %8 = vector.multi_reduction <add>, %3, %cst_4 [1] : vector<2x1024xf32> to vector<2xf32>
    %9 = vector.shape_cast %8 : vector<2xf32> to vector<2x1xf32>
    %cst_5 = arith.constant dense<0.000000e+00> : vector<2xf32>
    %10 = vector.multi_reduction <add>, %4, %cst_5 [1] : vector<2x1024xf32> to vector<2xf32>
    %11 = vector.shape_cast %10 : vector<2xf32> to vector<2x1xf32>
    %c0_6 = arith.constant 0 : index
    %c0_7 = arith.constant 0 : index
    %12 = vector.load %arg4[%c0_6, %c0_7] : memref<2x3xf32, #tpu.memory_space<vmem>>, vector<2x3xf32>
    %13 = tpu.concatenate %7, %9, %11 in 1 : vector<2x1xf32>, vector<2x1xf32>, vector<2x1xf32> -> vector<2x3xf32>
    %14 = arith.addf %12, %13 : vector<2x3xf32>
    %c0_8 = arith.constant 0 : index
    %c0_9 = arith.constant 0 : index
    %15 = vector.load %arg4[%c0_8, %c0_9] : memref<2x3xf32, #tpu.memory_space<vmem>>, vector<2x3xf32>
    tpu.vector_store %arg4[%c0_8, %c0_9], %14 {strides = array<i32>} : memref<2x3xf32, #tpu.memory_space<vmem>>, vector<2x3xf32>,
    %c0_i32_10 = arith.constant 0 : i32
    %16 = arith.cmpi eq, %arg0, %c0_i32_10 : i32
    %17 = arith.extui %16 : i1 to i32
    %c0_i32_11 = arith.constant 0 : i32
    %18 = arith.cmpi ne, %17, %c0_i32_11 : i32
    scf.if %18 {
      %c0_12 = arith.constant 0 : index
      %c0_13 = arith.constant 0 : index
      %19 = vector.load %arg4[%c0_12, %c0_13] : memref<2x3xf32, #tpu.memory_space<vmem>>, vector<2x3xf32>
      %20 = vector.extract_strided_slice %19 {offsets = [0, 0], sizes = [2, 1], strides = [1, 1]} : vector<2x3xf32> to vector<2x1xf32>
      %cst_14 = arith.constant 1.000000e+00 : f32
      %21 = vector.broadcast %cst_14 : f32 to vector<2x1xf32>
      %22 = arith.addf %20, %21 : vector<2x1xf32>
      %cst_15 = arith.constant 2.000000e+00 : f32
      %23 = vector.broadcast %cst_15 : f32 to vector<2x1xf32>
      %24 = arith.mulf %23, %22 : vector<2x1xf32>
      %25 = vector.extract_strided_slice %19 {offsets = [0, 1], sizes = [2, 1], strides = [1, 1]} : vector<2x3xf32> to vector<2x1xf32>
      %26 = vector.extract_strided_slice %19 {offsets = [0, 2], sizes = [2, 1], strides = [1, 1]} : vector<2x3xf32> to vector<2x1xf32>
      %27 = arith.addf %25, %26 : vector<2x1xf32>
      %cst_16 = arith.constant 1.000000e+00 : f32
      %28 = vector.broadcast %cst_16 : f32 to vector<2x1xf32>
      %29 = arith.addf %27, %28 : vector<2x1xf32>
      %30 = arith.divf %24, %29 : vector<2x1xf32>
      %cst_17 = arith.constant dense<0.000000e+00> : vector<1xf32>
      %31 = vector.multi_reduction <add>, %30, %cst_17 [0] : vector<2x1xf32> to vector<1xf32>
      %32 = vector.shape_cast %31 : vector<1xf32> to vector<1x1xf32>
      %cst_18 = arith.constant 2.000000e+00 : f32
      %33 = vector.broadcast %cst_18 : f32 to vector<1x1xf32>
      %34 = arith.divf %32, %33 : vector<1x1xf32>
      %cst_19 = arith.constant 1.000000e+00 : f32
      %35 = vector.broadcast %cst_19 : f32 to vector<1x1xf32>
      %36 = arith.subf %35, %34 : vector<1x1xf32>
      %c0_20 = arith.constant 0 : index
      %c0_21 = arith.constant 0 : index
      %37 = vector.load %arg3[%c0_20, %c0_21] : memref<1x1xf32, #tpu.memory_space<vmem>>, vector<1x1xf32>
      tpu.vector_store %arg3[%c0_20, %c0_21], %36 {strides = array<i32>} : memref<1x1xf32, #tpu.memory_space<vmem>>, vector<1x1xf32>,
    } else {
    }
    return
  }
  func.func @transform_0(%arg0: i32) -> (i32, i32) {
    %c0_i32 = arith.constant 0 : i32
    %c0_i32_0 = arith.constant 0 : i32
    return %c0_i32, %arg0 : i32, i32
  }
  func.func @transform_1(%arg0: i32) -> (i32, i32) {
    %c0_i32 = arith.constant 0 : i32
    %c0_i32_0 = arith.constant 0 : i32
    return %c0_i32, %arg0 : i32, i32
  }
  func.func @transform_2(%arg0: i32) -> (i32, i32) {
    %c0_i32 = arith.constant 0 : i32
    %c0_i32_0 = arith.constant 0 : i32
    %c0_i32_1 = arith.constant 0 : i32
    return %c0_i32, %c0_i32_0 : i32, i32
  }
}

</mosaic_0001>

<llo_original>
// kernel: tpu_custom_call.1
$region0: #{tpu_custom_call.1}
  #allocation0 [shape = 'u32[]', space=smem, size = 0x4, offset = 0x4, fixed_abs, tag = 'smem constant byte address 0x4 - core index']
  #allocation1 [shape = 'u32[144,128]{1,0:T(1,128)}', space=vmem, size = 0x12000, scoped, tag = 'internal scratch']
  #allocation2 [shape = 'f32[2,3]{1,0:T(2,128)}', space=vmem, size = 0x400, scoped, tag = 'scratch operand']
  %s0 = inlined_call_operand.hbm [shape: f32[2,1024], index: 0, kind: input, shape index: {}]
  %s1 = inlined_call_operand.hbm [shape: f32[2,1024], index: 1, kind: input, shape index: {}]
  %s2 = inlined_call_operand.hbm [shape: f32[1,1], index: 2, kind: output, shape index: {}]
  %s3 = sld [smem:[#allocation0]]
  $region34: #{tpu_custom_call.1} parent=0
    _
  %s5 = ssub.s32 1, %s3
  %s6 = scalar_select 0, %s5, %s3
  $region1: #{tpu_custom_call.1} parent=0
    #allocation3 [shape = 'u8[8192]{0}', space=vmem, size = 0x2000, scoped, tag = 'input window, operand 0, single buffered']
    #allocation4 [shape = 's32[1]{0}', space=sflag, size = 0x4, scoped, tag = 'scoped memory for tpu_custom_call.1']
    #allocation5 [shape = 's32[1]{0}', space=sflag, size = 0x4, scoped, tag = 'scoped memory for tpu_custom_call.1']
    #allocation6 [shape = 'u8[8192]{0}', space=vmem, size = 0x2000, scoped, tag = 'input window, operand 1, single buffered']
    #allocation7 [shape = 's32[1]{0}', space=sflag, size = 0x4, scoped, tag = 'scoped memory for tpu_custom_call.1']
    #allocation8 [shape = 'u8[512]{0}', space=vmem, size = 0x400, scoped, tag = 'output window, operand 0, single buffered']
    %7 = vsyncpa [#allocation4], 0
    %8 = vsyncpa [#allocation7], 0
    %9 = vsyncpa [#allocation5], 0
    // Predicated region
    $region2: #{tpu_custom_call.1} parent=1 // pred_check
      _
    $region3: #{tpu_custom_call.1} parent=1 // pred_check_branch
      %11 = sbr.rel (0) target = $region5
    $region4: #{tpu_custom_call.1} parent=1 // pred_region
      %s13 = ssub.s32 256, 256
      %14 = vsyncadd [#allocation4], %s13
      %s16 = sshll.u32 [#allocation3], 4
      %s17 = int_to_ptr.vmem [resolvable:$true] %s16
      %19 = dma.hbm_to_vmem [thread:$0]  %s0, 256, %s17, [#allocation4]
    $region5: #{tpu_custom_call.1} parent=1 // pred_fallthru
      _
    // Predicated region
    $region6: #{tpu_custom_call.1} parent=1 // pred_check
      _
    $region7: #{tpu_custom_call.1} parent=1 // pred_check_branch
      %21 = sbr.rel (0) target = $region9
    $region8: #{tpu_custom_call.1} parent=1 // pred_region
      %s23 = ssub.s32 256, 256
      %24 = vsyncadd [#allocation7], %s23
      %s26 = sshll.u32 [#allocation6], 4
      %s27 = int_to_ptr.vmem [resolvable:$true] %s26
      %29 = dma.hbm_to_vmem [thread:$0]  %s1, 256, %s27, [#allocation7]
    $region9: #{tpu_custom_call.1} parent=1 // pred_fallthru
      _
    // Predicated region
    $region10: #{tpu_custom_call.1} parent=1 // pred_check
      _
    $region11: #{tpu_custom_call.1} parent=1 // pred_check_branch
      %31 = sbr.rel (0) target = $region13
    $region12: #{tpu_custom_call.1} parent=1 // pred_region
      %32 = dma.done [#allocation4], 256
    $region13: #{tpu_custom_call.1} parent=1 // pred_fallthru
      _
    // Predicated region
    $region14: #{tpu_custom_call.1} parent=1 // pred_check
      _
    $region15: #{tpu_custom_call.1} parent=1 // pred_check_branch
      %34 = sbr.rel (0) target = $region17
    $region16: #{tpu_custom_call.1} parent=1 // pred_region
      %35 = dma.done [#allocation7], 256
    $region17: #{tpu_custom_call.1} parent=1 // pred_fallthru
      _
    %p36 = scmp.eq.s32.totalorder 0, 0
    // Predicated region
    $region18: #{tpu_custom_call.1} parent=1 // pred_check
      %p37 = pneg %p36
    $region19: #{tpu_custom_call.1} parent=1 // pred_check_branch
      %39 = sbr.rel (%p37) target = $region21
    $region20: #{tpu_custom_call.1} parent=1 // pred_region
      %vm40 = vcmask 17408
      %41 = vst.msk [vmem:[#allocation2] sm:$0x3] %vm40, 0.0
    $region21: #{tpu_custom_call.1} parent=1 // pred_fallthru
      _
    %v42 = vld [vmem:[#allocation3] sm:$0xff]
    %v43 = vld [vmem:[#allocation3 + $0x8] sm:$0xff]
    %v44 = vld [vmem:[#allocation6] sm:$0xff]
    %v45 = vld [vmem:[#allocation6 + $0x8] sm:$0xff]
    %v46 = vmul.f32 %v42, %v44
    %v47 = vmul.f32 %v43, %v45
    %v50 = vcombine.high %v46, %v46
    %v52 = vunpack.c.l.s4 1983009808
    %v53 = vunpack.c.0.s8 %v52
    %v54 = vlaneseq
    %v55 = vshrl.u32 %v54, 7
    %v56 = vsub.s32 %v53, %v55
    %v57 = vrot.slane %v46, %v56
    %v59 = vunpack.c.l.s4 1983009808
    %v60 = vunpack.c.0.s8 %v59
    %v61 = vlaneseq
    %v62 = vshrl.u32 %v61, 7
    %v63 = vsub.s32 %v60, %v62
    %v64 = vrot.slane %v50, %v63
    %v65 = vcombine.high %v57, %v57
    %v66 = vcombine.high %v64, %v64
    %v67 = vcombine.high %v47, %v47
    %v69 = vunpack.c.l.s4 1983009808
    %v70 = vunpack.c.0.s8 %v69
    %v71 = vlaneseq
    %v72 = vshrl.u32 %v71, 7
    %v73 = vsub.s32 %v70, %v72
    %v74 = vrot.slane %v47, %v73
    %v76 = vunpack.c.l.s4 1983009808
    %v77 = vunpack.c.0.s8 %v76
    %v78 = vlaneseq
    %v79 = vshrl.u32 %v78, 7
    %v80 = vsub.s32 %v77, %v79
    %v81 = vrot.slane %v67, %v80
    %v82 = vcombine.high %v74, %v74
    %v83 = vcombine.high %v81, %v81
    %vm92 = vcmask 1041408
    %v93 = vsel %vm92, %v57, 0.0
    %v94 = vsel %vm92, %v65, 0.0
    %v95 = vadd.f32 %v93, %v94
    %v96 = vsel %vm92, %v64, 0.0
    %v97 = vadd.f32 %v95, %v96
    %v98 = vsel %vm92, %v66, 0.0
    %v99 = vadd.f32 %v97, %v98
    %v100 = vsel %vm92, %v74, 0.0
    %v101 = vadd.f32 %v99, %v100
    %v102 = vsel %vm92, %v82, 0.0
    %v103 = vadd.f32 %v101, %v102
    %v104 = vsel %vm92, %v81, 0.0
    %v105 = vadd.f32 %v103, %v104
    %v106 = vsel %vm92, %v83, 0.0
    %v107 = vadd.f32 %v105, %v106
    %108 = vadd.xlane.f32.xlu0 %v107
    %v109 = vpop.xlane.xlu0 %108
    %v112 = vcombine.high %v42, %v42
    %v114 = vunpack.c.l.s4 1983009808
    %v115 = vunpack.c.0.s8 %v114
    %v116 = vlaneseq
    %v117 = vshrl.u32 %v116, 7
    %v118 = vsub.s32 %v115, %v117
    %v119 = vrot.slane %v42, %v118
    %v121 = vunpack.c.l.s4 1983009808
    %v122 = vunpack.c.0.s8 %v121
    %v123 = vlaneseq
    %v124 = vshrl.u32 %v123, 7
    %v125 = vsub.s32 %v122, %v124
    %v126 = vrot.slane %v112, %v125
    %v127 = vcombine.high %v119, %v119
    %v128 = vcombine.high %v126, %v126
    %v129 = vcombine.high %v43, %v43
    %v131 = vunpack.c.l.s4 1983009808
    %v132 = vunpack.c.0.s8 %v131
    %v133 = vlaneseq
    %v134 = vshrl.u32 %v133, 7
    %v135 = vsub.s32 %v132, %v134
    %v136 = vrot.slane %v43, %v135
    %v138 = vunpack.c.l.s4 1983009808
    %v139 = vunpack.c.0.s8 %v138
    %v140 = vlaneseq
    %v141 = vshrl.u32 %v140, 7
    %v142 = vsub.s32 %v139, %v141
    %v143 = vrot.slane %v129, %v142
    %v144 = vcombine.high %v136, %v136
    %v145 = vcombine.high %v143, %v143
    %v154 = vsel %vm92, %v119, 0.0
    %v155 = vsel %vm92, %v127, 0.0
    %v156 = vadd.f32 %v154, %v155
    %v157 = vsel %vm92, %v126, 0.0
    %v158 = vadd.f32 %v156, %v157
    %v159 = vsel %vm92, %v128, 0.0
    %v160 = vadd.f32 %v158, %v159
    %v161 = vsel %vm92, %v136, 0.0
    %v162 = vadd.f32 %v160, %v161
    %v163 = vsel %vm92, %v144, 0.0
    %v164 = vadd.f32 %v162, %v163
    %v165 = vsel %vm92, %v143, 0.0
    %v166 = vadd.f32 %v164, %v165
    %v167 = vsel %vm92, %v145, 0.0
    %v168 = vadd.f32 %v166, %v167
    %169 = vadd.xlane.f32.xlu0 %v168
    %v170 = vpop.xlane.xlu0 %169
    %v173 = vcombine.high %v44, %v44
    %v175 = vunpack.c.l.s4 1983009808
    %v176 = vunpack.c.0.s8 %v175
    %v177 = vlaneseq
    %v178 = vshrl.u32 %v177, 7
    %v179 = vsub.s32 %v176, %v178
    %v180 = vrot.slane %v44, %v179
    %v182 = vunpack.c.l.s4 1983009808
    %v183 = vunpack.c.0.s8 %v182
    %v184 = vlaneseq
    %v185 = vshrl.u32 %v184, 7
    %v186 = vsub.s32 %v183, %v185
    %v187 = vrot.slane %v173, %v186
    %v188 = vcombine.high %v180, %v180
    %v189 = vcombine.high %v187, %v187
    %v190 = vcombine.high %v45, %v45
    %v192 = vunpack.c.l.s4 1983009808
    %v193 = vunpack.c.0.s8 %v192
    %v194 = vlaneseq
    %v195 = vshrl.u32 %v194, 7
    %v196 = vsub.s32 %v193, %v195
    %v197 = vrot.slane %v45, %v196
    %v199 = vunpack.c.l.s4 1983009808
    %v200 = vunpack.c.0.s8 %v199
    %v201 = vlaneseq
    %v202 = vshrl.u32 %v201, 7
    %v203 = vsub.s32 %v200, %v202
    %v204 = vrot.slane %v190, %v203
    %v205 = vcombine.high %v197, %v197
    %v206 = vcombine.high %v204, %v204
    %v215 = vsel %vm92, %v180, 0.0
    %v216 = vsel %vm92, %v188, 0.0
    %v217 = vadd.f32 %v215, %v216
    %v218 = vsel %vm92, %v187, 0.0
    %v219 = vadd.f32 %v217, %v218
    %v220 = vsel %vm92, %v189, 0.0
    %v221 = vadd.f32 %v219, %v220
    %v222 = vsel %vm92, %v197, 0.0
    %v223 = vadd.f32 %v221, %v222
    %v224 = vsel %vm92, %v205, 0.0
    %v225 = vadd.f32 %v223, %v224
    %v226 = vsel %vm92, %v204, 0.0
    %v227 = vadd.f32 %v225, %v226
    %v228 = vsel %vm92, %v206, 0.0
    %v229 = vadd.f32 %v227, %v228
    %230 = vadd.xlane.f32.xlu0 %v229
    %v231 = vpop.xlane.xlu0 %230
    %v232 = vld [vmem:[#allocation2] sm:$0x3]
    %vm233 = vcmask 7168
    %v234 = vsel %vm233, %v109, %v170
    %vm235 = vcmask 15360
    %v236 = vsel %vm235, %v234, %v231
    %v237 = vadd.f32 %v232, %v236
    %vm238 = vcmask 17408
    %239 = vst.msk [vmem:[#allocation2] sm:$0x3] %vm238, %v237
    // Predicated region
    $region22: #{tpu_custom_call.1} parent=1 // pred_check
      %p240 = pneg %p36
    $region23: #{tpu_custom_call.1} parent=1 // pred_check_branch
      %242 = sbr.rel (%p240) target = $region25
    $region24: #{tpu_custom_call.1} parent=1 // pred_region
      %v243 = vld [vmem:[#allocation2] sm:$0x3]
      %v244 = vadd.f32 %v243, 1.0
      %v245 = vmul.f32 %v244, 2.0
      %247 = vrot.lane.b32.xlu0 %v243, 127
      %v248 = vpop.permute.xlu0 %247
      %v250 = vadd.f32 %v243, %v248
      %v251 = vadd.f32 %v250, 1.0
      %253 = vrot.lane.b32.xlu0 %v251, 127
      %v254 = vpop.permute.xlu0 %253
      %v256 = vrcp.pop %v254
      %v257 = vmul.f32 %v245, %v256
      %vm258 = vcmask 1024
      %v259 = vsel %vm258, %v257, 0.0
      %v260 = vrot.slane %v259, 4
      %v261 = vadd.f32 %v259, %v260
      %v262 = vrot.slane %v261, 2
      %v263 = vadd.f32 %v261, %v262
      %v264 = vrot.slane %v263, 1
      %v265 = vadd.f32 %v263, %v264
      %v266 = vrcp.pop 2.0
      %v267 = vmul.f32 %v265, %v266
      %v268 = vsub.f32 1.0, %v267
      %vm269 = vcmask 0
      %270 = vst.msk [vmem:[#allocation8] sm:$0x1] %vm269, %v268
    $region25: #{tpu_custom_call.1} parent=1 // pred_fallthru
      _
    // Predicated region
    $region26: #{tpu_custom_call.1} parent=1 // pred_check
      _
    $region27: #{tpu_custom_call.1} parent=1 // pred_check_branch
      %272 = sbr.rel (0) target = $region29
    $region28: #{tpu_custom_call.1} parent=1 // pred_region
      %s274 = ssub.s32 16, 16
      %275 = vsyncadd [#allocation5], %s274
      %s277 = sshll.u32 [#allocation8], 4
      %s278 = int_to_ptr.vmem [resolvable:$true] %s277
      %280 = dma.vmem_to_hbm [thread:$0]  %s278, 16, %s2, [#allocation5]
    $region29: #{tpu_custom_call.1} parent=1 // pred_fallthru
      _
    // Predicated region
    $region30: #{tpu_custom_call.1} parent=1 // pred_check
      _
    $region31: #{tpu_custom_call.1} parent=1 // pred_check_branch
      %282 = sbr.rel (0) target = $region33
    $region32: #{tpu_custom_call.1} parent=1 // pred_region
      %283 = dma.done [#allocation5], 16
    $region33: #{tpu_custom_call.1} parent=1 // pred_fallthru
      _
    %284 = vsyncpa [#allocation4], 1
    %285 = vsyncpa [#allocation7], 1
    %286 = vsyncpa [#allocation5], 1

</llo_original>
